<compile_context>
chip_gen: v7x
topology: tpu7x:2x2x1
jax: 0.10.0
libtpu: 0.0.40
codegen_flags: <defaults>
</compile_context>

<pallas_src>
import functools

import jax
import jax.numpy as jnp
from jax.experimental import pallas as pl
from jax.experimental.pallas import tpu as pltpu

_LANES = 128
_MAX_BLOCK_ROWS = 8192                 # 8192*128*4B = 4 MiB / input / buffer
_VMEM_LIMIT_BYTES = 48 * 1024 * 1024   # 3 inputs x 2 buffers x 4 MiB ~= 24 MiB
                                       # + 4 KiB acc; < 64 MiB (v7x physical).


def _num_tensorcores() -> int:
    """TensorCores a single Pallas program can span via a 'parallel' axis."""
    try:
        kind = jax.devices()[0].device_kind.lower()
    except Exception:
        return 1
    # v4 / v5p megacore and v7x expose 2 TensorCores per device; v5e / v6e
    # have a single TensorCore, where a size-2 'parallel' axis is pure waste.
    if "v4" in kind or "v5p" in kind or "7x" in kind or "v7" in kind:
        return 2
    return 1


def _context_loss_kernel(g_ref, c_ref, w_ref, out_ref, acc_ref, *,
                         total_rows, block_rows, blocks_per_slice,
                         needs_mask):
    p = pl.program_id(0)            # parallel slice (TensorCore) index
    i = pl.program_id(1)            # sequential block index within the slice

    @pl.when(i == 0)
    def _():
        acc_ref[...] = jnp.zeros_like(acc_ref)

    def _diff():
        g = g_ref[...].astype(jnp.float32)
        c = c_ref[...].astype(jnp.float32)
        w = w_ref[...].astype(jnp.float32)
        # |w*g - w*c| == |w*(g-c)| up to a <=1-ulp reassociation difference;
        # saves one VPU multiply per vreg and is sign-safe for any w.
        return jnp.abs(w * (g - c))

    def _accumulate(d):
        r = d.shape[0]
        if r % 8 == 0:
            # Fold the block into a single (8,128) vreg: pure VPU adds
            # (no XLU), one acc load + one acc store per grid step.
            acc_ref[...] += d.reshape(r // 8, 8, _LANES).sum(axis=0)
        else:
            # Tiny single-block input whose row count is not a multiple of 8:
            # fall back to a (cheap) sublane reduce into the first acc row.
            acc_ref[0:1, :] += jnp.sum(d, axis=0, keepdims=True)

    if not needs_mask:
        # Every block is full and in range: unmasked fast path.
        _accumulate(_diff())
    else:
        logical_block = p * blocks_per_slice + i
        block_start = logical_block * block_rows
        is_full = block_start + block_rows <= total_rows

        @pl.when(is_full)
        def _():
            _accumulate(_diff())

        # Block straddling `total_rows`: Pallas only DMAs the valid rows of an
        # edge block (the rest of the VMEM buffer is stale), so it must take
        # the masked path.
        @pl.when(jnp.logical_not(is_full) & (block_start < total_rows))
        def _():
            row = jax.lax.broadcasted_iota(jnp.int32, (block_rows, _LANES), 0)
            d = jnp.where(block_start + row < total_rows, _diff(),
                          jnp.float32(0.0))
            _accumulate(d)

        # Clamped duplicate blocks (block_start >= total_rows) skip compute.

    @pl.when(i == pl.num_programs(1) - 1)
    def _():
        out_ref[0, 0] = jnp.sum(acc_ref[...])


def _to_rows(x):
    """Reshape (copy-free for contiguous inputs) to a (rows, 128) slab."""
    flat = x.reshape(-1)
    n = flat.shape[0]
    rem = n % _LANES
    if rem:
        # TODO(synk): mask the final partial row in-kernel instead; jnp.pad
        # materializes a full copy for element counts not divisible by 128.
        flat = jnp.pad(flat, (0, _LANES - rem))
    return flat.reshape(-1, _LANES)


def context_loss(generated, corrupted, weight_mask):
    """Masked L1 loss (mean reduction), matching nn.L1Loss()(w*g, w*c)."""
    assert generated.shape == corrupted.shape == weight_mask.shape
    n_elems = generated.size

    g2 = _to_rows(generated)
    c2 = _to_rows(corrupted)
    w2 = _to_rows(weight_mask)

    total_rows = g2.shape[0]
    # Full-extent block for small inputs (always a legal block shape);
    # otherwise a large streaming block (multiple of 8 sublanes).
    block_rows = min(total_rows, _MAX_BLOCK_ROWS)
    total_blocks = pl.cdiv(total_rows, block_rows)

    num_slices = min(_num_tensorcores(), total_blocks)
    blocks_per_slice = pl.cdiv(total_blocks, num_slices)

    # Masking is needed only if the last block is ragged, or if the slice
    # split produces clamped duplicate blocks.
    needs_mask = (total_rows % block_rows != 0) or (
        num_slices * blocks_per_slice != total_blocks)

    kernel = functools.partial(
        _context_loss_kernel,
        total_rows=total_rows,
        block_rows=block_rows,
        blocks_per_slice=blocks_per_slice,
        needs_mask=needs_mask,
    )

    def in_map(p, i):
        blk = p * blocks_per_slice + i
        if needs_mask:
            # Clamp so duplicate blocks of the last slice never DMA OOB; the
            # in-kernel gating skips their accumulate entirely.
            blk = jnp.minimum(blk, total_blocks - 1)
        return (blk, 0)

    in_spec = pl.BlockSpec((block_rows, _LANES), in_map)
    out_spec = pl.BlockSpec(
        (1, 1), lambda p, i: (p, 0), memory_space=pltpu.MemorySpace.SMEM
    )

    partials = pl.pallas_call(
        kernel,
        out_shape=jax.ShapeDtypeStruct((num_slices, 1), jnp.float32),
        grid_spec=pltpu.PrefetchScalarGridSpec(
            num_scalar_prefetch=0,
            grid=(num_slices, blocks_per_slice),
            in_specs=[in_spec, in_spec, in_spec],
            out_specs=out_spec,
            scratch_shapes=[pltpu.VMEM((8, _LANES), jnp.float32)],
        ),
        compiler_params=pltpu.CompilerParams(
            dimension_semantics=("parallel", "arbitrary"),
            vmem_limit_bytes=_VMEM_LIMIT_BYTES,
        ),
    )(g2, c2, w2)

    return jnp.sum(partials) / jnp.float32(n_elems)


def _reference(generated, corrupted, weight_mask):
    return jnp.mean(
        jnp.abs(weight_mask * generated - weight_mask * corrupted)
    )


if __name__ == "__main__":
    key = jax.random.PRNGKey(0)
    k1, k2, k3 = jax.random.split(key, 3)

    # Small NCHW shapes consistent with the module's forward.
    shape = (2, 4, 16, 16)
    generated = jax.random.normal(k1, shape, dtype=jnp.float32)
    corrupted = jax.random.normal(k2, shape, dtype=jnp.float32)
    # weight mask in [0, 1], like a (soft) inpainting mask
    weight_mask = jax.random.uniform(k3, shape, dtype=jnp.float32)

    loss = context_loss(generated, corrupted, weight_mask)
    loss = jax.block_until_ready(loss)

    ref = _reference(generated, corrupted, weight_mask)
    assert jnp.allclose(loss, ref, rtol=1e-5, atol=1e-6), (loss, ref)

    print("KERNEL_OK")
</pallas_src>

<mosaic_0001>
module attributes {stable_mosaic.version = 11 : i64} {
  func.func @_context_loss_kernel(%arg0: i32, %arg1: i32, %arg2: memref<16x128xf32, #tpu.memory_space<vmem>>, %arg3: memref<16x128xf32, #tpu.memory_space<vmem>>, %arg4: memref<16x128xf32, #tpu.memory_space<vmem>>, %arg5: memref<1x1xf32, #tpu.memory_space<smem>>, %arg6: memref<8x128xf32, #tpu.memory_space<vmem>>) attributes {dimension_semantics = [#tpu.dimension_semantics<parallel>, #tpu.dimension_semantics<arbitrary>], iteration_bounds = array<i64: 1, 1>, scalar_prefetch = 0 : i64, scratch_operands = 1 : i64, tpu.core_type = #tpu.core_type<tc>, window_params = [{transform_indices = @transform_0, window_bounds = array<i64: 16, 128>}, {transform_indices = @transform_1, window_bounds = array<i64: 16, 128>}, {transform_indices = @transform_2, window_bounds = array<i64: 16, 128>}, {transform_indices = @transform_3, window_bounds = array<i64: 1, 1>}]} {
    %c0_i32 = arith.constant 0 : i32
    %0 = arith.cmpi eq, %arg1, %c0_i32 : i32
    %1 = arith.extui %0 : i1 to i32
    %c0_i32_0 = arith.constant 0 : i32
    %2 = arith.cmpi ne, %1, %c0_i32_0 : i32
    scf.if %2 {
      %cst_12 = arith.constant 0.000000e+00 : f32
      %17 = vector.broadcast %cst_12 : f32 to vector<8x128xf32>
      %c0_13 = arith.constant 0 : index
      %c0_14 = arith.constant 0 : index
      %18 = vector.load %arg6[%c0_13, %c0_14] : memref<8x128xf32, #tpu.memory_space<vmem>>, vector<8x128xf32>
      tpu.vector_store %arg6[%c0_13, %c0_14], %17 {strides = array<i32>} : memref<8x128xf32, #tpu.memory_space<vmem>>, vector<8x128xf32>,
    } else {
    }
    %c0 = arith.constant 0 : index
    %c0_1 = arith.constant 0 : index
    %3 = vector.load %arg2[%c0, %c0_1] : memref<16x128xf32, #tpu.memory_space<vmem>>, vector<16x128xf32>
    %c0_2 = arith.constant 0 : index
    %c0_3 = arith.constant 0 : index
    %4 = vector.load %arg3[%c0_2, %c0_3] : memref<16x128xf32, #tpu.memory_space<vmem>>, vector<16x128xf32>
    %c0_4 = arith.constant 0 : index
    %c0_5 = arith.constant 0 : index
    %5 = vector.load %arg4[%c0_4, %c0_5] : memref<16x128xf32, #tpu.memory_space<vmem>>, vector<16x128xf32>
    %6 = arith.subf %3, %4 : vector<16x128xf32>
    %7 = arith.mulf %5, %6 : vector<16x128xf32>
    %8 = math.absf %7 : vector<16x128xf32>
    %c0_6 = arith.constant 0 : index
    %c0_7 = arith.constant 0 : index
    %9 = vector.load %arg6[%c0_6, %c0_7] : memref<8x128xf32, #tpu.memory_space<vmem>>, vector<8x128xf32>
    %10 = vector.shape_cast %8 : vector<16x128xf32> to vector<2x8x128xf32>
    %cst = arith.constant dense<0.000000e+00> : vector<8x128xf32>
    %11 = vector.multi_reduction <add>, %10, %cst [0] : vector<2x8x128xf32> to vector<8x128xf32>
    %12 = arith.addf %9, %11 : vector<8x128xf32>
    %c0_8 = arith.constant 0 : index
    %c0_9 = arith.constant 0 : index
    %13 = vector.load %arg6[%c0_8, %c0_9] : memref<8x128xf32, #tpu.memory_space<vmem>>, vector<8x128xf32>
    tpu.vector_store %arg6[%c0_8, %c0_9], %12 {strides = array<i32>} : memref<8x128xf32, #tpu.memory_space<vmem>>, vector<8x128xf32>,
    %c0_i32_10 = arith.constant 0 : i32
    %14 = arith.cmpi eq, %arg1, %c0_i32_10 : i32
    %15 = arith.extui %14 : i1 to i32
    %c0_i32_11 = arith.constant 0 : i32
    %16 = arith.cmpi ne, %15, %c0_i32_11 : i32
    scf.if %16 {
      %c0_12 = arith.constant 0 : index
      %c0_13 = arith.constant 0 : index
      %17 = vector.load %arg6[%c0_12, %c0_13] : memref<8x128xf32, #tpu.memory_space<vmem>>, vector<8x128xf32>
      %18 = vector.shape_cast %17 : vector<8x128xf32> to vector<1x8x128xf32>
      %cst_14 = arith.constant dense<0.000000e+00> : vector<1xf32>
      %19 = vector.multi_reduction <add>, %18, %cst_14 [1, 2] : vector<1x8x128xf32> to vector<1xf32>
      %20 = vector.shape_cast %19 : vector<1xf32> to vector<1x1x1xf32>
      %21 = vector.extract %20[0, 0, 0] : f32 from vector<1x1x1xf32>
      %c0_15 = arith.constant 0 : index
      %c0_16 = arith.constant 0 : index
      %22 = memref.load %arg5[%c0_15, %c0_16] : memref<1x1xf32, #tpu.memory_space<smem>>
      memref.store %21, %arg5[%c0_15, %c0_16] : memref<1x1xf32, #tpu.memory_space<smem>>
    } else {
    }
    return
  }
  func.func @transform_0(%arg0: i32, %arg1: i32) -> (i32, i32) {
    %c1_i32 = arith.constant 1 : i32
    %0 = arith.muli %arg0, %c1_i32 : i32
    %1 = arith.addi %0, %arg1 : i32
    %c0_i32 = arith.constant 0 : i32
    %c0_i32_0 = arith.constant 0 : i32
    return %1, %c0_i32 : i32, i32
  }
  func.func @transform_1(%arg0: i32, %arg1: i32) -> (i32, i32) {
    %c1_i32 = arith.constant 1 : i32
    %0 = arith.muli %arg0, %c1_i32 : i32
    %1 = arith.addi %0, %arg1 : i32
    %c0_i32 = arith.constant 0 : i32
    %c0_i32_0 = arith.constant 0 : i32
    return %1, %c0_i32 : i32, i32
  }
  func.func @transform_2(%arg0: i32, %arg1: i32) -> (i32, i32) {
    %c1_i32 = arith.constant 1 : i32
    %0 = arith.muli %arg0, %c1_i32 : i32
    %1 = arith.addi %0, %arg1 : i32
    %c0_i32 = arith.constant 0 : i32
    %c0_i32_0 = arith.constant 0 : i32
    return %1, %c0_i32 : i32, i32
  }
  func.func @transform_3(%arg0: i32, %arg1: i32) -> (i32, i32) {
    %c0_i32 = arith.constant 0 : i32
    %c0_i32_0 = arith.constant 0 : i32
    return %arg0, %c0_i32 : i32, i32
  }
}

</mosaic_0001>

<llo_original>
// kernel: tpu_custom_call.1
$region0: #{tpu_custom_call.1}
  #allocation0 [shape = 'u32[]', space=smem, size = 0x4, offset = 0x4, fixed_abs, tag = 'smem constant byte address 0x4 - core index']
  #allocation1 [shape = 'u32[144,128]{1,0:T(1,128)}', space=vmem, size = 0x12000, scoped, tag = 'internal scratch']
  #allocation2 [shape = 'f32[8,128]{1,0:T(8,128)}', space=vmem, size = 0x1000, scoped, tag = 'scratch operand']
  %s0 = inlined_call_operand.hbm [shape: f32[16,128], index: 0, kind: input, shape index: {}]
  %s1 = inlined_call_operand.hbm [shape: f32[16,128], index: 1, kind: input, shape index: {}]
  %s2 = inlined_call_operand.hbm [shape: f32[16,128], index: 2, kind: input, shape index: {}]
  %s3 = inlined_call_operand.hbm [shape: f32[1,1], index: 3, kind: output, shape index: {}]
  %s4 = sld [smem:[#allocation0]]
  $region42: #{tpu_custom_call.1} parent=0
    _
  %s6 = ssub.s32 1, %s4
  %s7 = scalar_select 0, %s6, %s4
  $region1: #{tpu_custom_call.1} parent=0
    #allocation3 [shape = 'u8[8192]{0}', space=vmem, size = 0x2000, scoped, tag = 'input window, operand 0, single buffered']
    #allocation4 [shape = 's32[1]{0}', space=sflag, size = 0x4, scoped, tag = 'scoped memory for tpu_custom_call.1']
    #allocation5 [shape = 's32[1]{0}', space=sflag, size = 0x4, scoped, tag = 'scoped memory for tpu_custom_call.1']
    #allocation6 [shape = 'u8[8192]{0}', space=vmem, size = 0x2000, scoped, tag = 'input window, operand 1, single buffered']
    #allocation7 [shape = 's32[1]{0}', space=sflag, size = 0x4, scoped, tag = 'scoped memory for tpu_custom_call.1']
    #allocation8 [shape = 'u8[8192]{0}', space=vmem, size = 0x2000, scoped, tag = 'input window, operand 2, single buffered']
    #allocation9 [shape = 'u8[512]{0}', space=smem, size = 0x200, scoped, tag = 'output window, operand 0, single buffered']
    %8 = vsyncpa [#allocation4], 0
    %9 = vsyncpa [#allocation7], 0
    %10 = vsyncpa [#allocation5], 0
    // Predicated region
    $region2: #{tpu_custom_call.1} parent=1 // pred_check
      _
    $region3: #{tpu_custom_call.1} parent=1 // pred_check_branch
      %12 = sbr.rel (0) target = $region5
    $region4: #{tpu_custom_call.1} parent=1 // pred_region
      %s13 = sadd.s32 0, 0
      %s14 = smul.u32 2, %s13
      %s16 = ssub.s32 256, 256
      %17 = vsyncadd [#allocation4], %s16
      %s18 = smul.addr %s14, 128
      %s19 = scalar_lea.hbm %s0, %s18
      %s20 = sshll.u32 [#allocation3], 4
      %s21 = int_to_ptr.vmem [resolvable:$true] %s20
      %26 = dma.hbm_to_vmem [thread:$0]  %s19, 256, %s21, [#allocation4], 128, 128, 8
    $region5: #{tpu_custom_call.1} parent=1 // pred_fallthru
      _
    // Predicated region
    $region6: #{tpu_custom_call.1} parent=1 // pred_check
      _
    $region7: #{tpu_custom_call.1} parent=1 // pred_check_branch
      %28 = sbr.rel (0) target = $region9
    $region8: #{tpu_custom_call.1} parent=1 // pred_region
      %s29 = sadd.s32 0, 0
      %s30 = smul.u32 2, %s29
      %s32 = ssub.s32 256, 256
      %33 = vsyncadd [#allocation7], %s32
      %s34 = smul.addr %s30, 128
      %s35 = scalar_lea.hbm %s1, %s34
      %s36 = sshll.u32 [#allocation6], 4
      %s37 = int_to_ptr.vmem [resolvable:$true] %s36
      %42 = dma.hbm_to_vmem [thread:$0]  %s35, 256, %s37, [#allocation7], 128, 128, 8
    $region9: #{tpu_custom_call.1} parent=1 // pred_fallthru
      _
    // Predicated region
    $region10: #{tpu_custom_call.1} parent=1 // pred_check
      _
    $region11: #{tpu_custom_call.1} parent=1 // pred_check_branch
      %44 = sbr.rel (0) target = $region13
    $region12: #{tpu_custom_call.1} parent=1 // pred_region
      %s45 = sadd.s32 0, 0
      %s46 = smul.u32 2, %s45
      %s48 = ssub.s32 256, 256
      %49 = vsyncadd [#allocation7], %s48
      %s50 = smul.addr %s46, 128
      %s51 = scalar_lea.hbm %s2, %s50
      %s52 = sshll.u32 [#allocation8], 4
      %s53 = int_to_ptr.vmem [resolvable:$true] %s52
      %58 = dma.hbm_to_vmem [thread:$0]  %s51, 256, %s53, [#allocation7], 128, 128, 8
    $region13: #{tpu_custom_call.1} parent=1 // pred_fallthru
      _
    // Predicated region
    $region14: #{tpu_custom_call.1} parent=1 // pred_check
      _
    $region15: #{tpu_custom_call.1} parent=1 // pred_check_branch
      %60 = sbr.rel (0) target = $region17
    $region16: #{tpu_custom_call.1} parent=1 // pred_region
      %61 = dma.done [#allocation4], 256
    $region17: #{tpu_custom_call.1} parent=1 // pred_fallthru
      _
    // Predicated region
    $region18: #{tpu_custom_call.1} parent=1 // pred_check
      _
    $region19: #{tpu_custom_call.1} parent=1 // pred_check_branch
      %63 = sbr.rel (0) target = $region21
    $region20: #{tpu_custom_call.1} parent=1 // pred_region
      %64 = dma.done [#allocation7], 256
    $region21: #{tpu_custom_call.1} parent=1 // pred_fallthru
      _
    // Predicated region
    $region22: #{tpu_custom_call.1} parent=1 // pred_check
      _
    $region23: #{tpu_custom_call.1} parent=1 // pred_check_branch
      %66 = sbr.rel (0) target = $region25
    $region24: #{tpu_custom_call.1} parent=1 // pred_region
      %67 = dma.done [#allocation7], 256
    $region25: #{tpu_custom_call.1} parent=1 // pred_fallthru
      _
    %s68 = sadd.s32 0, 0
    %s69 = smul.u32 2, %s68
    %s70 = sadd.s32 0, 0
    %s71 = smul.u32 2, %s70
    %s72 = sadd.s32 0, 0
    %s73 = smul.u32 2, %s72
    %p74 = scmp.eq.s32.totalorder 0, 0
    // Predicated region
    $region26: #{tpu_custom_call.1} parent=1 // pred_check
      %p75 = pneg %p74
    $region27: #{tpu_custom_call.1} parent=1 // pred_check_branch
      %77 = sbr.rel (%p75) target = $region29
    $region28: #{tpu_custom_call.1} parent=1 // pred_region
      %78 = vst [vmem:[#allocation2] sm:$0xff] 0.0
    $region29: #{tpu_custom_call.1} parent=1 // pred_fallthru
      _
    %v79 = vld [vmem:[#allocation3] sm:$0xff]
    %v80 = vld [vmem:[#allocation3 + $0x8] sm:$0xff]
    %v81 = vld [vmem:[#allocation6] sm:$0xff]
    %v82 = vld [vmem:[#allocation6 + $0x8] sm:$0xff]
    %v83 = vld [vmem:[#allocation8] sm:$0xff]
    %v84 = vld [vmem:[#allocation8 + $0x8] sm:$0xff]
    %v85 = vsub.f32 %v79, %v81
    %v86 = vsub.f32 %v80, %v82
    %v87 = vmul.f32 %v83, %v85
    %v88 = vmul.f32 %v84, %v86
    %v89 = vand.u32 2147483647, %v87
    %v90 = vand.u32 2147483647, %v88
    %v91 = vld [vmem:[#allocation2] sm:$0xff]
    %v92 = vadd.f32 %v89, %v90
    %v93 = vadd.f32 %v91, %v92
    %94 = vst [vmem:[#allocation2] sm:$0xff] %v93
    // Predicated region
    $region30: #{tpu_custom_call.1} parent=1 // pred_check
      %p95 = pneg %p74
    $region31: #{tpu_custom_call.1} parent=1 // pred_check_branch
      %97 = sbr.rel (%p95) target = $region33
    $region32: #{tpu_custom_call.1} parent=1 // pred_region
      %v98 = vld [vmem:[#allocation2] sm:$0xff]
      %99 = vadd.xlane.f32.xlu0 %v98
      %v100 = vpop.xlane.xlu0 %99
      %v101 = vrot.slane %v100, 4
      %v102 = vadd.f32 %v100, %v101
      %v103 = vrot.slane %v102, 2
      %v104 = vadd.f32 %v102, %v103
      %v105 = vrot.slane %v104, 1
      %v106 = vadd.f32 %v104, %v105
      %s107 = vtos %v106
      %s108 = scalar_lea.smem [#allocation9], 0
      %109 = sst [smem:[%s108]] %s107
    $region33: #{tpu_custom_call.1} parent=1 // pred_fallthru
      _
    // Predicated region
    $region34: #{tpu_custom_call.1} parent=1 // pred_check
      _
    $region35: #{tpu_custom_call.1} parent=1 // pred_check_branch
      %111 = sbr.rel (0) target = $region37
    $region36: #{tpu_custom_call.1} parent=1 // pred_region
      %s113 = ssub.s32 16, 16
      %114 = vsyncadd [#allocation5], %s113
      %117 = dma.smem_to_hbm [#allocation9], 16, %s3, [#allocation5]
    $region37: #{tpu_custom_call.1} parent=1 // pred_fallthru
      _
    // Predicated region
    $region38: #{tpu_custom_call.1} parent=1 // pred_check
      _
    $region39: #{tpu_custom_call.1} parent=1 // pred_check_branch
      %119 = sbr.rel (0) target = $region41
    $region40: #{tpu_custom_call.1} parent=1 // pred_region
      %120 = dma.done [#allocation5], 16
    $region41: #{tpu_custom_call.1} parent=1 // pred_fallthru
      _
    %121 = sfence
    %122 = vsyncpa [#allocation4], 1
    %123 = vsyncpa [#allocation7], 1
    %124 = vsyncpa [#allocation5], 1

</llo_original>
